<compile_context>
chip_gen: v7x
topology: tpu7x:2x2x1
jax: 0.10.0
libtpu: 0.0.40
codegen_flags: <defaults>
</compile_context>

<pallas_src>
import jax
import jax.numpy as jnp
from jax.experimental import pallas as pl
from jax.experimental.pallas import tpu as pltpu


LANE = 128
SUBLANE = 16  # bf16 sublane packing (16, 128)


def _round_up(x, m):
    return ((x + m - 1) // m) * m


def _vmem_cap_bytes():
    """Generation-aware VMEM request cap."""
    try:
        phys = int(pltpu.get_tpu_info().vmem_capacity_bytes)
    except Exception:
        phys = 128 * 1024 * 1024
    if phys <= 64 * 1024 * 1024:
        # v7x-class TensorCore: 64 MiB physical -> leave headroom for compiler scratch.
        return 48 * 1024 * 1024
    # v5e / v6e: 128 MiB physical.
    return 100 * 1024 * 1024


def qnet_kernel(s_ref, w1_ref, w2_ref, w3_ref, b_ref, q_ref):
    """One batch tile: q = relu(relu(s @ W1 + b1) @ W2 + b2) @ W3 + b3."""
    mid_p = w1_ref.shape[1]
    act_p = w3_ref.shape[1]
    action_dim = q_ref.shape[1]

    b_all = b_ref[...]                 # (3, n_max) f32, rows = [b1 | b2 | b3] (zero-padded)
    b1 = b_all[0:1, :mid_p]
    b2 = b_all[1:2, :mid_p]
    b3 = b_all[2:3, :act_p]

    # Layer 1: in-kernel bf16 cast of the unpadded s tile, f32 MXU accumulation.
    s = s_ref[...].astype(jnp.bfloat16)
    h1 = jnp.dot(s, w1_ref[...], preferred_element_type=jnp.float32)
    h1 = jnp.maximum(h1 + b1, 0.0)

    # Layer 2.
    h2 = jnp.dot(h1.astype(jnp.bfloat16), w2_ref[...],
                 preferred_element_type=jnp.float32)
    h2 = jnp.maximum(h2 + b2, 0.0)

    # Layer 3 (no activation); store only the real action_dim columns.
    q = jnp.dot(h2.astype(jnp.bfloat16), w3_ref[...],
                preferred_element_type=jnp.float32)
    q = q + b3
    q_ref[...] = q[:, :action_dim].astype(q_ref.dtype)


def prepare_qnet_params(params):
    """Pad/cast weights + fuse biases ONCE (hoisted out of the per-call path)."""
    w1, b1, w2, b2, w3, b3 = params
    state_dim, mid_dim = w1.shape
    action_dim = w3.shape[1]
    mid_p = _round_up(mid_dim, LANE)
    act_p = _round_up(action_dim, LANE)
    n_max = max(mid_p, act_p)

    def pad2(x, rows, cols, dtype):
        out = jnp.zeros((rows, cols), dtype)
        return out.at[: x.shape[0], : x.shape[1]].set(x.astype(dtype))

    # Note: W1's K dim stays UNPADDED (= state_dim) to match the unpadded s tile.
    w1_p = pad2(w1, state_dim, mid_p, jnp.bfloat16)
    w2_p = pad2(w2, mid_p, mid_p, jnp.bfloat16)
    w3_p = pad2(w3, mid_p, act_p, jnp.bfloat16)

    b_all = jnp.zeros((3, n_max), jnp.float32)
    b_all = b_all.at[0, :mid_dim].set(b1.reshape(-1).astype(jnp.float32))
    b_all = b_all.at[1, :mid_dim].set(b2.reshape(-1).astype(jnp.float32))
    b_all = b_all.at[2, :action_dim].set(b3.reshape(-1).astype(jnp.float32))

    return dict(w1=w1_p, w2=w2_p, w3=w3_p, b=b_all,
                state_dim=state_dim, mid_dim=mid_dim, action_dim=action_dim)


def qnet_forward(s, prepared, *, batch_tile=None):
    w1_p, w2_p, w3_p, b_all = prepared["w1"], prepared["w2"], prepared["w3"], prepared["b"]
    state_dim = prepared["state_dim"]
    action_dim = prepared["action_dim"]
    mid_p = w1_p.shape[1]
    act_p = w3_p.shape[1]
    n_max = b_all.shape[1]

    B = s.shape[0]
    assert s.shape[1] == state_dim

    # ---- batch tiling: big tiles (amortize ~0.35us/step + DMA setup), multiple of 16;
    #      guarantee >=2 grid steps for large B so v7x dual-TC "parallel" sharding engages.
    if batch_tile is None:
        batch_tile = min(2048, _round_up(B, SUBLANE))
        if B >= 512:
            batch_tile = min(batch_tile,
                             _round_up(_round_up(B, SUBLANE) // 2, SUBLANE))
    batch_tile = max(SUBLANE, _round_up(batch_tile, SUBLANE))
    B_pad = _round_up(B, batch_tile)
    grid = (B_pad // batch_tile,)

    # Only pad the batch axis, and only when the tile does not divide it.
    if B_pad != B:
        s_in = jnp.zeros((B_pad, state_dim), s.dtype).at[:B].set(s)
    else:
        s_in = s

    # ---- VMEM budget (conservative: counts weights double-buffered) + generation cap ----
    f32_b, bf16_b = 4, 2
    vmem_needed = (
        2 * batch_tile * _round_up(state_dim, LANE) * f32_b       # s tile, double-buffered
        + 2 * batch_tile * LANE * f32_b                           # q tile (lane-padded in VMEM)
        + 2 * (state_dim * mid_p + mid_p * mid_p + mid_p * act_p) * bf16_b  # weights
        + 2 * 3 * n_max * f32_b                                   # fused biases
        + 3 * batch_tile * mid_p * f32_b                          # h1 / h2 / q f32 temporaries
    )
    vmem_limit = int(min(_vmem_cap_bytes(),
                         max(int(1.25 * vmem_needed), 8 * 1024 * 1024)))

    # ---- cost estimate so XLA schedules around the custom call ----
    flops = 2 * B_pad * (state_dim * mid_p + mid_p * mid_p + mid_p * act_p)
    bytes_accessed = (
        B_pad * state_dim * f32_b
        + B_pad * action_dim * f32_b
        + (state_dim * mid_p + mid_p * mid_p + mid_p * act_p) * bf16_b
        + 3 * n_max * f32_b
    )
    cost = pl.CostEstimate(flops=flops, transcendentals=0,
                           bytes_accessed=bytes_accessed)

    def run(single_buffer_weights):
        def const_spec(shape):
            if single_buffer_weights:
                return pl.BlockSpec(shape, lambda i: (0, 0),
                                    pipeline_mode=pl.Buffered(1))
            return pl.BlockSpec(shape, lambda i: (0, 0))

        return pl.pallas_call(
            qnet_kernel,
            out_shape=jax.ShapeDtypeStruct((B_pad, action_dim), jnp.float32),
            grid=grid,
            in_specs=[
                pl.BlockSpec((batch_tile, state_dim), lambda i: (i, 0)),  # s (unpadded dims)
                const_spec((state_dim, mid_p)),                           # w1
                const_spec((mid_p, mid_p)),                               # w2
                const_spec((mid_p, act_p)),                               # w3
                const_spec((3, n_max)),                                   # fused biases
            ],
            out_specs=pl.BlockSpec((batch_tile, action_dim), lambda i: (i, 0)),
            compiler_params=pltpu.CompilerParams(
                dimension_semantics=("parallel",),
                vmem_limit_bytes=vmem_limit,
            ),
            cost_estimate=cost,
        )(s_in, w1_p, w2_p, w3_p, b_all)

    try:
        q_full = run(True)    # weights/biases single-buffered (constant index_map)
    except Exception:
        q_full = run(False)   # fall back to default double-buffering if unsupported

    return q_full[:B] if B_pad != B else q_full


def init_qnet_params(key, state_dim, action_dim, mid_dim):
    """PyTorch nn.Linear default init: U[-1/sqrt(fan_in), 1/sqrt(fan_in)]."""
    def linear(key, fan_in, fan_out):
        kw, kb = jax.random.split(key)
        bound = 1.0 / jnp.sqrt(fan_in)
        w = jax.random.uniform(kw, (fan_in, fan_out), jnp.float32, -bound, bound)
        b = jax.random.uniform(kb, (1, fan_out), jnp.float32, -bound, bound)
        return w, b

    k1, k2, k3 = jax.random.split(key, 3)
    w1, b1 = linear(k1, state_dim, mid_dim)
    w2, b2 = linear(k2, mid_dim, mid_dim)
    w3, b3 = linear(k3, mid_dim, action_dim)
    return (w1, b1, w2, b2, w3, b3)


def qnet_reference(s, params):
    w1, b1, w2, b2, w3, b3 = params
    h1 = jnp.maximum(s @ w1 + b1, 0.0)
    h2 = jnp.maximum(h1 @ w2 + b2, 0.0)
    return h2 @ w3 + b3


if __name__ == "__main__":
    # Small shapes consistent with QNet(state_dim, action_dim, mid_dim).
    batch, state_dim, action_dim, mid_dim = 8, 16, 4, 32

    key = jax.random.PRNGKey(0)
    k_params, k_in_small, k_in_big = jax.random.split(key, 3)
    params = init_qnet_params(k_params, state_dim, action_dim, mid_dim)
    prepared = prepare_qnet_params(params)   # one-time pad/cast of weights + fused biases

    # Small-batch run (grid=(1,), batch padded 8 -> 16 rows).
    s_small = jax.random.normal(k_in_small, (batch, state_dim), jnp.float32)
    q_small = jax.block_until_ready(qnet_forward(s_small, prepared))
    q_small_ref = qnet_reference(s_small, params)
    assert q_small.shape == (batch, action_dim)
    assert jnp.allclose(q_small, q_small_ref, atol=2e-2, rtol=2e-2), \
        "Pallas output mismatch vs reference (small batch)"

    # Larger-batch run exercising the multi-step pipelined/parallel grid (2 tiles of 512).
    big_batch = 1024
    s_big = jax.random.normal(k_in_big, (big_batch, state_dim), jnp.float32)
    q_big = jax.block_until_ready(qnet_forward(s_big, prepared))
    q_big_ref = qnet_reference(s_big, params)
    assert q_big.shape == (big_batch, action_dim)
    assert jnp.allclose(q_big, q_big_ref, atol=2e-2, rtol=2e-2), \
        "Pallas output mismatch vs reference (large batch)"

    print("KERNEL_OK")
</pallas_src>

<mosaic_0001>
module attributes {stable_mosaic.version = 11 : i64} {
  func.func @qnet_kernel(%arg0: i32, %arg1: memref<16x16xf32, #tpu.memory_space<vmem>>, %arg2: memref<16x128xbf16, #tpu.memory_space<vmem>>, %arg3: memref<128x128xbf16, #tpu.memory_space<vmem>>, %arg4: memref<128x128xbf16, #tpu.memory_space<vmem>>, %arg5: memref<3x128xf32, #tpu.memory_space<vmem>>, %arg6: memref<16x4xf32, #tpu.memory_space<vmem>>) attributes {dimension_semantics = [#tpu.dimension_semantics<parallel>], iteration_bounds = array<i64: 1>, scalar_prefetch = 0 : i64, scratch_operands = 0 : i64, tpu.core_type = #tpu.core_type<tc>, window_params = [{transform_indices = @transform_0, window_bounds = array<i64: 16, 16>}, {pipeline_mode = #tpu.pipeline_mode<synchronous>, transform_indices = @transform_1, window_bounds = array<i64: 16, 128>}, {pipeline_mode = #tpu.pipeline_mode<synchronous>, transform_indices = @transform_2, window_bounds = array<i64: 128, 128>}, {pipeline_mode = #tpu.pipeline_mode<synchronous>, transform_indices = @transform_3, window_bounds = array<i64: 128, 128>}, {pipeline_mode = #tpu.pipeline_mode<synchronous>, transform_indices = @transform_4, window_bounds = array<i64: 3, 128>}, {transform_indices = @transform_5, window_bounds = array<i64: 16, 4>}]} {
    %c0 = arith.constant 0 : index
    %c0_0 = arith.constant 0 : index
    %0 = vector.load %arg5[%c0, %c0_0] : memref<3x128xf32, #tpu.memory_space<vmem>>, vector<3x128xf32>
    %1 = vector.extract_strided_slice %0 {offsets = [0, 0], sizes = [1, 128], strides = [1, 1]} : vector<3x128xf32> to vector<1x128xf32>
    %2 = vector.extract_strided_slice %0 {offsets = [1, 0], sizes = [1, 128], strides = [1, 1]} : vector<3x128xf32> to vector<1x128xf32>
    %3 = vector.extract_strided_slice %0 {offsets = [2, 0], sizes = [1, 128], strides = [1, 1]} : vector<3x128xf32> to vector<1x128xf32>
    %c0_1 = arith.constant 0 : index
    %c0_2 = arith.constant 0 : index
    %4 = vector.load %arg1[%c0_1, %c0_2] : memref<16x16xf32, #tpu.memory_space<vmem>>, vector<16x16xf32>
    %5 = arith.truncf %4 : vector<16x16xf32> to vector<16x16xbf16>
    %c0_3 = arith.constant 0 : index
    %c0_4 = arith.constant 0 : index
    %6 = vector.load %arg2[%c0_3, %c0_4] : memref<16x128xbf16, #tpu.memory_space<vmem>>, vector<16x128xbf16>
    %cst = arith.constant dense<0.000000e+00> : vector<16x128xf32>
    %7 = tpu.matmul %5, %6, %cst {dimension_numbers = #tpu.dot_dimension_numbers<[1], [0], [0], [1], [0, 0, 1, 1], [], []>} : vector<16x16xbf16>, vector<16x128xbf16>, vector<16x128xf32> -> vector<16x128xf32>
    %8 = vector.broadcast %1 : vector<1x128xf32> to vector<16x128xf32>
    %9 = arith.addf %7, %8 : vector<16x128xf32>
    %cst_5 = arith.constant 0.000000e+00 : f32
    %10 = vector.broadcast %cst_5 : f32 to vector<16x128xf32>
    %11 = arith.maximumf %9, %10 : vector<16x128xf32>
    %12 = arith.truncf %11 : vector<16x128xf32> to vector<16x128xbf16>
    %c0_6 = arith.constant 0 : index
    %c0_7 = arith.constant 0 : index
    %13 = vector.load %arg3[%c0_6, %c0_7] : memref<128x128xbf16, #tpu.memory_space<vmem>>, vector<128x128xbf16>
    %cst_8 = arith.constant dense<0.000000e+00> : vector<16x128xf32>
    %14 = tpu.matmul %12, %13, %cst_8 {dimension_numbers = #tpu.dot_dimension_numbers<[1], [0], [0], [1], [0, 0, 1, 1], [], []>} : vector<16x128xbf16>, vector<128x128xbf16>, vector<16x128xf32> -> vector<16x128xf32>
    %15 = vector.broadcast %2 : vector<1x128xf32> to vector<16x128xf32>
    %16 = arith.addf %14, %15 : vector<16x128xf32>
    %cst_9 = arith.constant 0.000000e+00 : f32
    %17 = vector.broadcast %cst_9 : f32 to vector<16x128xf32>
    %18 = arith.maximumf %16, %17 : vector<16x128xf32>
    %19 = arith.truncf %18 : vector<16x128xf32> to vector<16x128xbf16>
    %c0_10 = arith.constant 0 : index
    %c0_11 = arith.constant 0 : index
    %20 = vector.load %arg4[%c0_10, %c0_11] : memref<128x128xbf16, #tpu.memory_space<vmem>>, vector<128x128xbf16>
    %cst_12 = arith.constant dense<0.000000e+00> : vector<16x128xf32>
    %21 = tpu.matmul %19, %20, %cst_12 {dimension_numbers = #tpu.dot_dimension_numbers<[1], [0], [0], [1], [0, 0, 1, 1], [], []>} : vector<16x128xbf16>, vector<128x128xbf16>, vector<16x128xf32> -> vector<16x128xf32>
    %22 = vector.broadcast %3 : vector<1x128xf32> to vector<16x128xf32>
    %23 = arith.addf %21, %22 : vector<16x128xf32>
    %24 = vector.extract_strided_slice %23 {offsets = [0, 0], sizes = [16, 4], strides = [1, 1]} : vector<16x128xf32> to vector<16x4xf32>
    %c0_13 = arith.constant 0 : index
    %c0_14 = arith.constant 0 : index
    %25 = vector.load %arg6[%c0_13, %c0_14] : memref<16x4xf32, #tpu.memory_space<vmem>>, vector<16x4xf32>
    tpu.vector_store %arg6[%c0_13, %c0_14], %24 {strides = array<i32>} : memref<16x4xf32, #tpu.memory_space<vmem>>, vector<16x4xf32>,
    return
  }
  func.func @transform_0(%arg0: i32) -> (i32, i32) {
    %c0_i32 = arith.constant 0 : i32
    %c0_i32_0 = arith.constant 0 : i32
    return %arg0, %c0_i32 : i32, i32
  }
  func.func @transform_1(%arg0: i32) -> (i32, i32) {
    %c0_i32 = arith.constant 0 : i32
    %c0_i32_0 = arith.constant 0 : i32
    %c0_i32_1 = arith.constant 0 : i32
    return %c0_i32, %c0_i32_0 : i32, i32
  }
  func.func @transform_2(%arg0: i32) -> (i32, i32) {
    %c0_i32 = arith.constant 0 : i32
    %c0_i32_0 = arith.constant 0 : i32
    %c0_i32_1 = arith.constant 0 : i32
    return %c0_i32, %c0_i32_0 : i32, i32
  }
  func.func @transform_3(%arg0: i32) -> (i32, i32) {
    %c0_i32 = arith.constant 0 : i32
    %c0_i32_0 = arith.constant 0 : i32
    %c0_i32_1 = arith.constant 0 : i32
    return %c0_i32, %c0_i32_0 : i32, i32
  }
  func.func @transform_4(%arg0: i32) -> (i32, i32) {
    %c0_i32 = arith.constant 0 : i32
    %c0_i32_0 = arith.constant 0 : i32
    %c0_i32_1 = arith.constant 0 : i32
    return %c0_i32, %c0_i32_0 : i32, i32
  }
  func.func @transform_5(%arg0: i32) -> (i32, i32) {
    %c0_i32 = arith.constant 0 : i32
    %c0_i32_0 = arith.constant 0 : i32
    return %arg0, %c0_i32 : i32, i32
  }
}

module attributes {stable_mosaic.version = 11 : i64} {
  func.func @qnet_kernel(%arg0: i32, %arg1: memref<16x16xf32, #tpu.memory_space<vmem>>, %arg2: memref<16x128xbf16, #tpu.memory_space<vmem>>, %arg3: memref<128x128xbf16, #tpu.memory_space<vmem>>, %arg4: memref<128x128xbf16, #tpu.memory_space<vmem>>, %arg5: memref<3x128xf32, #tpu.memory_space<vmem>>, %arg6: memref<16x4xf32, #tpu.memory_space<vmem>>) attributes {dimension_semantics = [#tpu.dimension_semantics<parallel>], iteration_bounds = array<i64: 1>, scalar_prefetch = 0 : i64, scratch_operands = 0 : i64, tpu.core_type = #tpu.core_type<tc>, window_params = [{transform_indices = @transform_0, window_bounds = array<i64: 16, 16>}, {pipeline_mode = #tpu.pipeline_mode<synchronous>, transform_indices = @transform_1, window_bounds = array<i64: 16, 128>}, {pipeline_mode = #tpu.pipeline_mode<synchronous>, transform_indices = @transform_2, window_bounds = array<i64: 128, 128>}, {pipeline_mode = #tpu.pipeline_mode<synchronous>, transform_indices = @transform_3, window_bounds = array<i64: 128, 128>}, {pipeline_mode = #tpu.pipeline_mode<synchronous>, transform_indices = @transform_4, window_bounds = array<i64: 3, 128>}, {transform_indices = @transform_5, window_bounds = array<i64: 16, 4>}]} {
    %c0 = arith.constant 0 : index
    %c0_0 = arith.constant 0 : index
    %0 = vector.load %arg5[%c0, %c0_0] : memref<3x128xf32, #tpu.memory_space<vmem>>, vector<3x128xf32>
    %1 = vector.extract_strided_slice %0 {offsets = [0, 0], sizes = [1, 128], strides = [1, 1]} : vector<3x128xf32> to vector<1x128xf32>
    %2 = vector.extract_strided_slice %0 {offsets = [1, 0], sizes = [1, 128], strides = [1, 1]} : vector<3x128xf32> to vector<1x128xf32>
    %3 = vector.extract_strided_slice %0 {offsets = [2, 0], sizes = [1, 128], strides = [1, 1]} : vector<3x128xf32> to vector<1x128xf32>
    %c0_1 = arith.constant 0 : index
    %c0_2 = arith.constant 0 : index
    %4 = vector.load %arg1[%c0_1, %c0_2] : memref<16x16xf32, #tpu.memory_space<vmem>>, vector<16x16xf32>
    %5 = arith.truncf %4 : vector<16x16xf32> to vector<16x16xbf16>
    %c0_3 = arith.constant 0 : index
    %c0_4 = arith.constant 0 : index
    %6 = vector.load %arg2[%c0_3, %c0_4] : memref<16x128xbf16, #tpu.memory_space<vmem>>, vector<16x128xbf16>
    %cst = arith.constant dense<0.000000e+00> : vector<16x128xf32>
    %7 = tpu.matmul %5, %6, %cst {dimension_numbers = #tpu.dot_dimension_numbers<[1], [0], [0], [1], [0, 0, 1, 1], [], []>} : vector<16x16xbf16>, vector<16x128xbf16>, vector<16x128xf32> -> vector<16x128xf32>
    %8 = vector.broadcast %1 : vector<1x128xf32> to vector<16x128xf32>
    %9 = arith.addf %7, %8 : vector<16x128xf32>
    %cst_5 = arith.constant 0.000000e+00 : f32
    %10 = vector.broadcast %cst_5 : f32 to vector<16x128xf32>
    %11 = arith.maximumf %9, %10 : vector<16x128xf32>
    %12 = arith.truncf %11 : vector<16x128xf32> to vector<16x128xbf16>
    %c0_6 = arith.constant 0 : index
    %c0_7 = arith.constant 0 : index
    %13 = vector.load %arg3[%c0_6, %c0_7] : memref<128x128xbf16, #tpu.memory_space<vmem>>, vector<128x128xbf16>
    %cst_8 = arith.constant dense<0.000000e+00> : vector<16x128xf32>
    %14 = tpu.matmul %12, %13, %cst_8 {dimension_numbers = #tpu.dot_dimension_numbers<[1], [0], [0], [1], [0, 0, 1, 1], [], []>} : vector<16x128xbf16>, vector<128x128xbf16>, vector<16x128xf32> -> vector<16x128xf32>
    %15 = vector.broadcast %2 : vector<1x128xf32> to vector<16x128xf32>
    %16 = arith.addf %14, %15 : vector<16x128xf32>
    %cst_9 = arith.constant 0.000000e+00 : f32
    %17 = vector.broadcast %cst_9 : f32 to vector<16x128xf32>
    %18 = arith.maximumf %16, %17 : vector<16x128xf32>
    %19 = arith.truncf %18 : vector<16x128xf32> to vector<16x128xbf16>
    %c0_10 = arith.constant 0 : index
    %c0_11 = arith.constant 0 : index
    %20 = vector.load %arg4[%c0_10, %c0_11] : memref<128x128xbf16, #tpu.memory_space<vmem>>, vector<128x128xbf16>
    %cst_12 = arith.constant dense<0.000000e+00> : vector<16x128xf32>
    %21 = tpu.matmul %19, %20, %cst_12 {dimension_numbers = #tpu.dot_dimension_numbers<[1], [0], [0], [1], [0, 0, 1, 1], [], []>} : vector<16x128xbf16>, vector<128x128xbf16>, vector<16x128xf32> -> vector<16x128xf32>
    %22 = vector.broadcast %3 : vector<1x128xf32> to vector<16x128xf32>
    %23 = arith.addf %21, %22 : vector<16x128xf32>
    %24 = vector.extract_strided_slice %23 {offsets = [0, 0], sizes = [16, 4], strides = [1, 1]} : vector<16x128xf32> to vector<16x4xf32>
    %c0_13 = arith.constant 0 : index
    %c0_14 = arith.constant 0 : index
    %25 = vector.load %arg6[%c0_13, %c0_14] : memref<16x4xf32, #tpu.memory_space<vmem>>, vector<16x4xf32>
    tpu.vector_store %arg6[%c0_13, %c0_14], %24 {strides = array<i32>} : memref<16x4xf32, #tpu.memory_space<vmem>>, vector<16x4xf32>,
    return
  }
  func.func @transform_0(%arg0: i32) -> (i32, i32) {
    %c0_i32 = arith.constant 0 : i32
    %c0_i32_0 = arith.constant 0 : i32
    return %arg0, %c0_i32 : i32, i32
  }
  func.func @transform_1(%arg0: i32) -> (i32, i32) {
    %c0_i32 = arith.constant 0 : i32
    %c0_i32_0 = arith.constant 0 : i32
    %c0_i32_1 = arith.constant 0 : i32
    return %c0_i32, %c0_i32_0 : i32, i32
  }
  func.func @transform_2(%arg0: i32) -> (i32, i32) {
    %c0_i32 = arith.constant 0 : i32
    %c0_i32_0 = arith.constant 0 : i32
    %c0_i32_1 = arith.constant 0 : i32
    return %c0_i32, %c0_i32_0 : i32, i32
  }
  func.func @transform_3(%arg0: i32) -> (i32, i32) {
    %c0_i32 = arith.constant 0 : i32
    %c0_i32_0 = arith.constant 0 : i32
    %c0_i32_1 = arith.constant 0 : i32
    return %c0_i32, %c0_i32_0 : i32, i32
  }
  func.func @transform_4(%arg0: i32) -> (i32, i32) {
    %c0_i32 = arith.constant 0 : i32
    %c0_i32_0 = arith.constant 0 : i32
    %c0_i32_1 = arith.constant 0 : i32
    return %c0_i32, %c0_i32_0 : i32, i32
  }
  func.func @transform_5(%arg0: i32) -> (i32, i32) {
    %c0_i32 = arith.constant 0 : i32
    %c0_i32_0 = arith.constant 0 : i32
    return %arg0, %c0_i32 : i32, i32
  }
}

</mosaic_0001>

<llo_original>
// kernel: tpu_custom_call.1
$region0: #{tpu_custom_call.1}
  #allocation0 [shape = 'u32[]', space=smem, size = 0x4, offset = 0x4, fixed_abs, tag = 'smem constant byte address 0x4 - core index']
  #allocation1 [shape = 'u32[144,128]{1,0:T(1,128)}', space=vmem, size = 0x12000, scoped, tag = 'internal scratch']
  %s0 = inlined_call_operand.hbm [shape: f32[16,16], index: 0, kind: input, shape index: {}]
  %s1 = inlined_call_operand.hbm [shape: bf16[16,128], index: 1, kind: input, shape index: {}]
  %s2 = inlined_call_operand.hbm [shape: bf16[128,128], index: 2, kind: input, shape index: {}]
  %s3 = inlined_call_operand.hbm [shape: bf16[128,128], index: 3, kind: input, shape index: {}]
  %s4 = inlined_call_operand.vmem [shape: f32[3,128], index: 4, kind: input, shape index: {}]
  %s5 = inlined_call_operand.vmem [shape: f32[16,4], index: 5, kind: output, shape index: {}]
  %s6 = sld [smem:[#allocation0]]
  $region46: #{tpu_custom_call.1} parent=0
    _
  %s8 = ssub.s32 1, %s6
  %s9 = scalar_select 0, %s8, %s6
  $region1: #{tpu_custom_call.1} parent=0
    #allocation2 [shape = 'u8[8192]{0}', space=vmem, size = 0x2000, scoped, tag = 'input window, operand 0, single buffered']
    #allocation3 [shape = 's32[1]{0}', space=sflag, size = 0x4, scoped, tag = 'scoped memory for tpu_custom_call.1']
    #allocation4 [shape = 'u8[4096]{0}', space=vmem, size = 0x1000, scoped, tag = 'input window, operand 1, single buffered']
    #allocation5 [shape = 's32[1]{0}', space=sflag, size = 0x4, scoped, tag = 'scoped memory for tpu_custom_call.1']
    #allocation6 [shape = 'u8[32768]{0}', space=vmem, size = 0x8000, scoped, tag = 'input window, operand 2, single buffered']
    #allocation7 [shape = 'u8[32768]{0}', space=vmem, size = 0x8000, scoped, tag = 'input window, operand 3, single buffered']
    #allocation8 [shape = 's32[1]{0}', space=sflag, size = 0x4, scoped, tag = 'scoped memory for tpu_custom_call.1']
    %10 = vsyncpa [#allocation3], 0
    %11 = vsyncpa [#allocation5], 0
    %12 = vsyncpa [#allocation8], 0
    // Predicated region
    $region2: #{tpu_custom_call.1} parent=1 // pred_check
      _
    $region3: #{tpu_custom_call.1} parent=1 // pred_check_branch
      %14 = sbr.rel (0) target = $region5
    $region4: #{tpu_custom_call.1} parent=1 // pred_region
      %s16 = ssub.s32 256, 256
      %17 = vsyncadd [#allocation3], %s16
      %s18 = sshll.u32 [#allocation2], 4
      %s19 = int_to_ptr.vmem [resolvable:$true] %s18
      %24 = dma.hbm_to_vmem [thread:$0]  %s0, 256, %s19, [#allocation3], 128, 128, 8
    $region5: #{tpu_custom_call.1} parent=1 // pred_fallthru
      _
    // Predicated region
    $region6: #{tpu_custom_call.1} parent=1 // pred_check
      _
    $region7: #{tpu_custom_call.1} parent=1 // pred_check_branch
      %26 = sbr.rel (0) target = $region9
    $region8: #{tpu_custom_call.1} parent=1 // pred_region
      %s28 = ssub.s32 128, 128
      %29 = vsyncadd [#allocation5], %s28
      %s30 = sshll.u32 [#allocation4], 4
      %s31 = int_to_ptr.vmem [resolvable:$true] %s30
      %36 = dma.hbm_to_vmem [thread:$0]  %s1, 128, %s31, [#allocation5], 64, 64, 4
    $region9: #{tpu_custom_call.1} parent=1 // pred_fallthru
      _
    // Predicated region
    $region10: #{tpu_custom_call.1} parent=1 // pred_check
      _
    $region11: #{tpu_custom_call.1} parent=1 // pred_check_branch
      %38 = sbr.rel (0) target = $region13
    $region12: #{tpu_custom_call.1} parent=1 // pred_region
      %s40 = ssub.s32 1024, 1024
      %41 = vsyncadd [#allocation5], %s40
      %s42 = sshll.u32 [#allocation6], 4
      %s43 = int_to_ptr.vmem [resolvable:$true] %s42
      %48 = dma.hbm_to_vmem [thread:$0]  %s2, 1024, %s43, [#allocation5], 64, 64, 4
    $region13: #{tpu_custom_call.1} parent=1 // pred_fallthru
      _
    // Predicated region
    $region14: #{tpu_custom_call.1} parent=1 // pred_check
      _
    $region15: #{tpu_custom_call.1} parent=1 // pred_check_branch
      %50 = sbr.rel (0) target = $region17
    $region16: #{tpu_custom_call.1} parent=1 // pred_region
      %s52 = ssub.s32 1024, 1024
      %53 = vsyncadd [#allocation8], %s52
      %s54 = sshll.u32 [#allocation7], 4
      %s55 = int_to_ptr.vmem [resolvable:$true] %s54
      %60 = dma.hbm_to_vmem [thread:$0]  %s3, 1024, %s55, [#allocation8], 64, 64, 4
    $region17: #{tpu_custom_call.1} parent=1 // pred_fallthru
      _
    // Predicated region
    $region18: #{tpu_custom_call.1} parent=1 // pred_check
      _
    $region19: #{tpu_custom_call.1} parent=1 // pred_check_branch
      %62 = sbr.rel (0) target = $region21
    $region20: #{tpu_custom_call.1} parent=1 // pred_region
      _
    $region21: #{tpu_custom_call.1} parent=1 // pred_fallthru
      _
    // Predicated region
    $region22: #{tpu_custom_call.1} parent=1 // pred_check
      _
    $region23: #{tpu_custom_call.1} parent=1 // pred_check_branch
      %64 = sbr.rel (0) target = $region25
    $region24: #{tpu_custom_call.1} parent=1 // pred_region
      %65 = dma.done [#allocation3], 256
    $region25: #{tpu_custom_call.1} parent=1 // pred_fallthru
      _
    // Predicated region
    $region26: #{tpu_custom_call.1} parent=1 // pred_check
      _
    $region27: #{tpu_custom_call.1} parent=1 // pred_check_branch
      %67 = sbr.rel (0) target = $region29
    $region28: #{tpu_custom_call.1} parent=1 // pred_region
      %68 = dma.done [#allocation5], 128
    $region29: #{tpu_custom_call.1} parent=1 // pred_fallthru
      _
    // Predicated region
    $region30: #{tpu_custom_call.1} parent=1 // pred_check
      _
    $region31: #{tpu_custom_call.1} parent=1 // pred_check_branch
      %70 = sbr.rel (0) target = $region33
    $region32: #{tpu_custom_call.1} parent=1 // pred_region
      %71 = dma.done [#allocation5], 1024
    $region33: #{tpu_custom_call.1} parent=1 // pred_fallthru
      _
    // Predicated region
    $region34: #{tpu_custom_call.1} parent=1 // pred_check
      _
    $region35: #{tpu_custom_call.1} parent=1 // pred_check_branch
      %73 = sbr.rel (0) target = $region37
    $region36: #{tpu_custom_call.1} parent=1 // pred_region
      %74 = dma.done [#allocation8], 1024
    $region37: #{tpu_custom_call.1} parent=1 // pred_fallthru
      _
    %v76 = vld [vmem:[%s4] sm:$0x7]
    %v77 = vld [vmem:[#allocation2] sm:$0xff]
    %v78 = vld [vmem:[#allocation2 + $0x8] sm:$0xff]
    %v79 = vpack.c.bf16 %v78, %v77
    %v80 = vld [vmem:[#allocation4] sm:$0xf]
    %v81 = vld [vmem:[#allocation4 + $0x4] sm:$0xf]
    %v82 = vlaneseq
    %v83 = vshrl.u32 %v82, 7
    %v84 = vsub.s32 0, %v83
    %v85 = vrot.slane %v76, %v84
    %v88 = vunpack.c.l.b16 %v80
    %v89 = vunpack.c.l.b16 %v81
    %v90 = vpack.c.b16 %v89, %v88
    %vm92 = vcmask 130048
    %v94 = vsel %vm92, %v79, 0
    %96 = vmatprep.subr.bf16.mxu0 0
    %97 = vmatpush1.bf16.msra.mxu0 %v90
    %98 = vmatprep.subr.bf16.mxu0 0
    %99 = vmatpush1.bf16.msra.mxu0 0
    %100 = vmatprep.subr.bf16.mxu0 0
    %101 = vmatpush1.bf16.msra.mxu0 0
    %102 = vmatprep.subr.bf16.mxu0 0
    %103 = vmatpush1.bf16.msra.mxu0 0
    %104 = vmatprep.subr.bf16.mxu0 0
    %105 = vmatpush1.bf16.msra.mxu0 0
    %106 = vmatprep.subr.bf16.mxu0 0
    %107 = vmatpush1.bf16.msra.mxu0 0
    %108 = vmatprep.subr.bf16.mxu0 0
    %109 = vmatpush1.bf16.msra.mxu0 0
    %110 = vmatprep.subr.bf16.mxu0 0
    %111 = vmatpush1.bf16.msra.mxu0 0
    %112 = vmatprep.subr.bf16.mxu0 0
    %113 = vmatpush1.bf16.msra.mxu0 0
    %114 = vmatprep.subr.bf16.mxu0 0
    %115 = vmatpush1.bf16.msra.mxu0 0
    %116 = vmatprep.subr.bf16.mxu0 0
    %117 = vmatpush1.bf16.msra.mxu0 0
    %118 = vmatprep.subr.bf16.mxu0 0
    %119 = vmatpush1.bf16.msra.mxu0 0
    %120 = vmatprep.subr.bf16.mxu0 0
    %121 = vmatpush1.bf16.msra.mxu0 0
    %122 = vmatprep.subr.bf16.mxu0 0
    %123 = vmatpush1.bf16.msra.mxu0 0
    %124 = vmatprep.subr.bf16.mxu0 0
    %125 = vmatpush1.bf16.msra.mxu0 0
    %126 = vmatprep.subr.bf16.mxu0 0
    %127 = vmatpush1.bf16.msra.mxu0 0
    %128 = vmatprep.mubr.bf16.mxu0 0
    %129 = vmatmul.mubr.bf16.gmra.mrb[0].mxu0 %v94
    %v130 = vpop.f32.mrb[0].mxu0
    %v131 = vadd.f32 %v85, %v130
    %v132 = vpop.f32.mrb[0].mxu0
    %v133 = vpop.f32.mrb[0].mxu0
    %v134 = vadd.f32 %v85, %v133
    %v135 = vpop.f32.mrb[0].mxu0
    %136 = vdwg.mxu0
    %v137 = vmax.f32 %v131, 0.0
    %v138 = vmax.f32 %v134, 0.0
    %v139 = vpack.c.bf16 %v138, %v137
    %v140 = vld [vmem:[#allocation6] sm:$0xf]
    %v141 = vld [vmem:[#allocation6 + $0x4] sm:$0xf]
    %v142 = vld [vmem:[#allocation6 + $0x8] sm:$0xf]
    %v143 = vld [vmem:[#allocation6 + $0xc] sm:$0xf]
    %v144 = vld [vmem:[#allocation6 + $0x10] sm:$0xf]
    %v145 = vld [vmem:[#allocation6 + $0x14] sm:$0xf]
    %v146 = vld [vmem:[#allocation6 + $0x18] sm:$0xf]
    %v147 = vld [vmem:[#allocation6 + $0x1c] sm:$0xf]
    %v148 = vld [vmem:[#allocation6 + $0x20] sm:$0xf]
    %v149 = vld [vmem:[#allocation6 + $0x24] sm:$0xf]
    %v150 = vld [vmem:[#allocation6 + $0x28] sm:$0xf]
    %v151 = vld [vmem:[#allocation6 + $0x2c] sm:$0xf]
    %v152 = vld [vmem:[#allocation6 + $0x30] sm:$0xf]
    %v153 = vld [vmem:[#allocation6 + $0x34] sm:$0xf]
    %v154 = vld [vmem:[#allocation6 + $0x38] sm:$0xf]
    %v155 = vld [vmem:[#allocation6 + $0x3c] sm:$0xf]
    %v156 = vlaneseq
    %v157 = vshrl.u32 %v156, 7
    %v158 = vsub.s32 1, %v157
    %v159 = vrot.slane %v76, %v158
    %v176 = vunpack.c.l.b16 %v140
    %v177 = vunpack.c.l.b16 %v141
    %v178 = vunpack.c.l.b16 %v142
    %v179 = vunpack.c.l.b16 %v143
    %v180 = vunpack.c.l.b16 %v144
    %v181 = vunpack.c.l.b16 %v145
    %v182 = vunpack.c.l.b16 %v146
    %v183 = vunpack.c.l.b16 %v147
    %v184 = vunpack.c.l.b16 %v148
    %v185 = vunpack.c.l.b16 %v149
    %v186 = vunpack.c.l.b16 %v150
    %v187 = vunpack.c.l.b16 %v151
    %v188 = vunpack.c.l.b16 %v152
    %v189 = vunpack.c.l.b16 %v153
    %v190 = vunpack.c.l.b16 %v154
    %v191 = vunpack.c.l.b16 %v155
    %v192 = vpack.c.b16 %v177, %v176
    %v193 = vpack.c.b16 %v179, %v178
    %v194 = vpack.c.b16 %v181, %v180
    %v195 = vpack.c.b16 %v183, %v182
    %v196 = vpack.c.b16 %v185, %v184
    %v197 = vpack.c.b16 %v187, %v186
    %v198 = vpack.c.b16 %v189, %v188
    %v199 = vpack.c.b16 %v191, %v190
    %208 = vmatprep.subr.bf16.mxu0 0
    %209 = vmatpush1.bf16.msra.mxu0 %v192
    %210 = vmatprep.subr.bf16.mxu0 0
    %211 = vmatpush1.bf16.msra.mxu0 %v193
    %212 = vmatprep.subr.bf16.mxu0 0
    %213 = vmatpush1.bf16.msra.mxu0 %v194
    %214 = vmatprep.subr.bf16.mxu0 0
    %215 = vmatpush1.bf16.msra.mxu0 %v195
    %216 = vmatprep.subr.bf16.mxu0 0
    %217 = vmatpush1.bf16.msra.mxu0 %v196
    %218 = vmatprep.subr.bf16.mxu0 0
    %219 = vmatpush1.bf16.msra.mxu0 %v197
    %220 = vmatprep.subr.bf16.mxu0 0
    %221 = vmatpush1.bf16.msra.mxu0 %v198
    %222 = vmatprep.subr.bf16.mxu0 0
    %223 = vmatpush1.bf16.msra.mxu0 %v199
    %224 = vmatprep.subr.bf16.mxu0 0
    %225 = vmatpush1.bf16.msra.mxu0 0
    %226 = vmatprep.subr.bf16.mxu0 0
    %227 = vmatpush1.bf16.msra.mxu0 0
    %228 = vmatprep.subr.bf16.mxu0 0
    %229 = vmatpush1.bf16.msra.mxu0 0
    %230 = vmatprep.subr.bf16.mxu0 0
    %231 = vmatpush1.bf16.msra.mxu0 0
    %232 = vmatprep.subr.bf16.mxu0 0
    %233 = vmatpush1.bf16.msra.mxu0 0
    %234 = vmatprep.subr.bf16.mxu0 0
    %235 = vmatpush1.bf16.msra.mxu0 0
    %236 = vmatprep.subr.bf16.mxu0 0
    %237 = vmatpush1.bf16.msra.mxu0 0
    %238 = vmatprep.subr.bf16.mxu0 0
    %239 = vmatpush1.bf16.msra.mxu0 0
    %240 = vmatprep.mubr.bf16.mxu0 0
    %241 = vmatmul.mubr.bf16.gmra.mrb[0].mxu0 %v139
    %v242 = vpop.f32.mrb[0].mxu0
    %v243 = vadd.f32 %v159, %v242
    %v244 = vpop.f32.mrb[0].mxu0
    %v245 = vpop.f32.mrb[0].mxu0
    %v246 = vadd.f32 %v159, %v245
    %v247 = vpop.f32.mrb[0].mxu0
    %248 = vdwg.mxu0
    %v249 = vmax.f32 %v243, 0.0
    %v250 = vmax.f32 %v246, 0.0
    %v251 = vpack.c.bf16 %v250, %v249
    %v252 = vld [vmem:[#allocation7] sm:$0xf]
    %v253 = vld [vmem:[#allocation7 + $0x4] sm:$0xf]
    %v254 = vld [vmem:[#allocation7 + $0x8] sm:$0xf]
    %v255 = vld [vmem:[#allocation7 + $0xc] sm:$0xf]
    %v256 = vld [vmem:[#allocation7 + $0x10] sm:$0xf]
    %v257 = vld [vmem:[#allocation7 + $0x14] sm:$0xf]
    %v258 = vld [vmem:[#allocation7 + $0x18] sm:$0xf]
    %v259 = vld [vmem:[#allocation7 + $0x1c] sm:$0xf]
    %v260 = vld [vmem:[#allocation7 + $0x20] sm:$0xf]
    %v261 = vld [vmem:[#allocation7 + $0x24] sm:$0xf]
    %v262 = vld [vmem:[#allocation7 + $0x28] sm:$0xf]
    %v263 = vld [vmem:[#allocation7 + $0x2c] sm:$0xf]
    %v264 = vld [vmem:[#allocation7 + $0x30] sm:$0xf]
    %v265 = vld [vmem:[#allocation7 + $0x34] sm:$0xf]
    %v266 = vld [vmem:[#allocation7 + $0x38] sm:$0xf]
    %v267 = vld [vmem:[#allocation7 + $0x3c] sm:$0xf]
    %v268 = vlaneseq
    %v269 = vshrl.u32 %v268, 7
    %v270 = vsub.s32 2, %v269
    %v271 = vrot.slane %v76, %v270
    %v288 = vunpack.c.l.b16 %v252
    %v289 = vunpack.c.l.b16 %v253
    %v290 = vunpack.c.l.b16 %v254
    %v291 = vunpack.c.l.b16 %v255
    %v292 = vunpack.c.l.b16 %v256
    %v293 = vunpack.c.l.b16 %v257
    %v294 = vunpack.c.l.b16 %v258
    %v295 = vunpack.c.l.b16 %v259
    %v296 = vunpack.c.l.b16 %v260
    %v297 = vunpack.c.l.b16 %v261
    %v298 = vunpack.c.l.b16 %v262
    %v299 = vunpack.c.l.b16 %v263
    %v300 = vunpack.c.l.b16 %v264
    %v301 = vunpack.c.l.b16 %v265
    %v302 = vunpack.c.l.b16 %v266
    %v303 = vunpack.c.l.b16 %v267
    %v304 = vpack.c.b16 %v289, %v288
    %v305 = vpack.c.b16 %v291, %v290
    %v306 = vpack.c.b16 %v293, %v292
    %v307 = vpack.c.b16 %v295, %v294
    %v308 = vpack.c.b16 %v297, %v296
    %v309 = vpack.c.b16 %v299, %v298
    %v310 = vpack.c.b16 %v301, %v300
    %v311 = vpack.c.b16 %v303, %v302
    %320 = vmatprep.subr.bf16.mxu0 0
    %321 = vmatpush1.bf16.msra.mxu0 %v304
    %322 = vmatprep.subr.bf16.mxu0 0
    %323 = vmatpush1.bf16.msra.mxu0 %v305
    %324 = vmatprep.subr.bf16.mxu0 0
    %325 = vmatpush1.bf16.msra.mxu0 %v306
    %326 = vmatprep.subr.bf16.mxu0 0
    %327 = vmatpush1.bf16.msra.mxu0 %v307
    %328 = vmatprep.subr.bf16.mxu0 0
    %329 = vmatpush1.bf16.msra.mxu0 %v308
    %330 = vmatprep.subr.bf16.mxu0 0
    %331 = vmatpush1.bf16.msra.mxu0 %v309
    %332 = vmatprep.subr.bf16.mxu0 0
    %333 = vmatpush1.bf16.msra.mxu0 %v310
    %334 = vmatprep.subr.bf16.mxu0 0
    %335 = vmatpush1.bf16.msra.mxu0 %v311
    %336 = vmatprep.subr.bf16.mxu0 0
    %337 = vmatpush1.bf16.msra.mxu0 0
    %338 = vmatprep.subr.bf16.mxu0 0
    %339 = vmatpush1.bf16.msra.mxu0 0
    %340 = vmatprep.subr.bf16.mxu0 0
    %341 = vmatpush1.bf16.msra.mxu0 0
    %342 = vmatprep.subr.bf16.mxu0 0
    %343 = vmatpush1.bf16.msra.mxu0 0
    %344 = vmatprep.subr.bf16.mxu0 0
    %345 = vmatpush1.bf16.msra.mxu0 0
    %346 = vmatprep.subr.bf16.mxu0 0
    %347 = vmatpush1.bf16.msra.mxu0 0
    %348 = vmatprep.subr.bf16.mxu0 0
    %349 = vmatpush1.bf16.msra.mxu0 0
    %350 = vmatprep.subr.bf16.mxu0 0
    %351 = vmatpush1.bf16.msra.mxu0 0
    %352 = vmatprep.mubr.bf16.mxu0 0
    %353 = vmatmul.mubr.bf16.gmra.mrb[0].mxu0 %v251
    %v354 = vpop.f32.mrb[0].mxu0
    %v355 = vadd.f32 %v271, %v354
    %v356 = vpop.f32.mrb[0].mxu0
    %v357 = vpop.f32.mrb[0].mxu0
    %v358 = vadd.f32 %v271, %v357
    %v359 = vpop.f32.mrb[0].mxu0
    %360 = vdwg.mxu0
    %vm361 = vcmask 31744
    %362 = vst.msk [vmem:[%s5] sm:$0xff] %vm361, %v355
    %363 = vst.msk [vmem:[%s5 + $0x8] sm:$0xff] %vm361, %v358
    // Predicated region
    $region38: #{tpu_custom_call.1} parent=1 // pred_check
      _
    $region39: #{tpu_custom_call.1} parent=1 // pred_check_branch
      %365 = sbr.rel (0) target = $region41
    $region40: #{tpu_custom_call.1} parent=1 // pred_region
      _
    $region41: #{tpu_custom_call.1} parent=1 // pred_fallthru
      _
    // Predicated region
    $region42: #{tpu_custom_call.1} parent=1 // pred_check
      _
    $region43: #{tpu_custom_call.1} parent=1 // pred_check_branch
      %367 = sbr.rel (0) target = $region45
    $region44: #{tpu_custom_call.1} parent=1 // pred_region
      _
    $region45: #{tpu_custom_call.1} parent=1 // pred_fallthru
      _
    %368 = vsyncpa [#allocation3], 1
    %369 = vsyncpa [#allocation5], 1
    %370 = vsyncpa [#allocation8], 1

// kernel: tpu_custom_call.1
$region0: #{tpu_custom_call.1}
  #allocation0 [shape = 'u32[]', space=smem, size = 0x4, offset = 0x4, fixed_abs, tag = 'smem constant byte address 0x4 - core index']
  #allocation1 [shape = 'u32[144,128]{1,0:T(1,128)}', space=vmem, size = 0x12000, scoped, tag = 'internal scratch']
  %s0 = inlined_call_operand.hbm [shape: f32[16,16], index: 0, kind: input, shape index: {}]
  %s1 = inlined_call_operand.hbm [shape: bf16[16,128], index: 1, kind: input, shape index: {}]
  %s2 = inlined_call_operand.hbm [shape: bf16[128,128], index: 2, kind: input, shape index: {}]
  %s3 = inlined_call_operand.hbm [shape: bf16[128,128], index: 3, kind: input, shape index: {}]
  %s4 = inlined_call_operand.vmem [shape: f32[3,128], index: 4, kind: input, shape index: {}]
  %s5 = inlined_call_operand.vmem [shape: f32[16,4], index: 5, kind: output, shape index: {}]
  %s6 = sld [smem:[#allocation0]]
  $region46: #{tpu_custom_call.1} parent=0
    _
  %s8 = ssub.s32 1, %s6
  %s9 = scalar_select 0, %s8, %s6
  $region1: #{tpu_custom_call.1} parent=0
    #allocation2 [shape = 'u8[8192]{0}', space=vmem, size = 0x2000, scoped, tag = 'input window, operand 0, single buffered']
    #allocation3 [shape = 's32[1]{0}', space=sflag, size = 0x4, scoped, tag = 'scoped memory for tpu_custom_call.1']
    #allocation4 [shape = 'u8[4096]{0}', space=vmem, size = 0x1000, scoped, tag = 'input window, operand 1, single buffered']
    #allocation5 [shape = 's32[1]{0}', space=sflag, size = 0x4, scoped, tag = 'scoped memory for tpu_custom_call.1']
    #allocation6 [shape = 'u8[32768]{0}', space=vmem, size = 0x8000, scoped, tag = 'input window, operand 2, single buffered']
    #allocation7 [shape = 'u8[32768]{0}', space=vmem, size = 0x8000, scoped, tag = 'input window, operand 3, single buffered']
    #allocation8 [shape = 's32[1]{0}', space=sflag, size = 0x4, scoped, tag = 'scoped memory for tpu_custom_call.1']
    %10 = vsyncpa [#allocation3], 0
    %11 = vsyncpa [#allocation5], 0
    %12 = vsyncpa [#allocation8], 0
    // Predicated region
    $region2: #{tpu_custom_call.1} parent=1 // pred_check
      _
    $region3: #{tpu_custom_call.1} parent=1 // pred_check_branch
      %14 = sbr.rel (0) target = $region5
    $region4: #{tpu_custom_call.1} parent=1 // pred_region
      %s16 = ssub.s32 256, 256
      %17 = vsyncadd [#allocation3], %s16
      %s18 = sshll.u32 [#allocation2], 4
      %s19 = int_to_ptr.vmem [resolvable:$true] %s18
      %24 = dma.hbm_to_vmem [thread:$0]  %s0, 256, %s19, [#allocation3], 128, 128, 8
    $region5: #{tpu_custom_call.1} parent=1 // pred_fallthru
      _
    // Predicated region
    $region6: #{tpu_custom_call.1} parent=1 // pred_check
      _
    $region7: #{tpu_custom_call.1} parent=1 // pred_check_branch
      %26 = sbr.rel (0) target = $region9
    $region8: #{tpu_custom_call.1} parent=1 // pred_region
      %s28 = ssub.s32 128, 128
      %29 = vsyncadd [#allocation5], %s28
      %s30 = sshll.u32 [#allocation4], 4
      %s31 = int_to_ptr.vmem [resolvable:$true] %s30
      %36 = dma.hbm_to_vmem [thread:$0]  %s1, 128, %s31, [#allocation5], 64, 64, 4
    $region9: #{tpu_custom_call.1} parent=1 // pred_fallthru
      _
    // Predicated region
    $region10: #{tpu_custom_call.1} parent=1 // pred_check
      _
    $region11: #{tpu_custom_call.1} parent=1 // pred_check_branch
      %38 = sbr.rel (0) target = $region13
    $region12: #{tpu_custom_call.1} parent=1 // pred_region
      %s40 = ssub.s32 1024, 1024
      %41 = vsyncadd [#allocation5], %s40
      %s42 = sshll.u32 [#allocation6], 4
      %s43 = int_to_ptr.vmem [resolvable:$true] %s42
      %48 = dma.hbm_to_vmem [thread:$0]  %s2, 1024, %s43, [#allocation5], 64, 64, 4
    $region13: #{tpu_custom_call.1} parent=1 // pred_fallthru
      _
    // Predicated region
    $region14: #{tpu_custom_call.1} parent=1 // pred_check
      _
    $region15: #{tpu_custom_call.1} parent=1 // pred_check_branch
      %50 = sbr.rel (0) target = $region17
    $region16: #{tpu_custom_call.1} parent=1 // pred_region
      %s52 = ssub.s32 1024, 1024
      %53 = vsyncadd [#allocation8], %s52
      %s54 = sshll.u32 [#allocation7], 4
      %s55 = int_to_ptr.vmem [resolvable:$true] %s54
      %60 = dma.hbm_to_vmem [thread:$0]  %s3, 1024, %s55, [#allocation8], 64, 64, 4
    $region17: #{tpu_custom_call.1} parent=1 // pred_fallthru
      _
    // Predicated region
    $region18: #{tpu_custom_call.1} parent=1 // pred_check
      _
    $region19: #{tpu_custom_call.1} parent=1 // pred_check_branch
      %62 = sbr.rel (0) target = $region21
    $region20: #{tpu_custom_call.1} parent=1 // pred_region
      _
    $region21: #{tpu_custom_call.1} parent=1 // pred_fallthru
      _
    // Predicated region
    $region22: #{tpu_custom_call.1} parent=1 // pred_check
      _
    $region23: #{tpu_custom_call.1} parent=1 // pred_check_branch
      %64 = sbr.rel (0) target = $region25
    $region24: #{tpu_custom_call.1} parent=1 // pred_region
      %65 = dma.done [#allocation3], 256
    $region25: #{tpu_custom_call.1} parent=1 // pred_fallthru
      _
    // Predicated region
    $region26: #{tpu_custom_call.1} parent=1 // pred_check
      _
    $region27: #{tpu_custom_call.1} parent=1 // pred_check_branch
      %67 = sbr.rel (0) target = $region29
    $region28: #{tpu_custom_call.1} parent=1 // pred_region
      %68 = dma.done [#allocation5], 128
    $region29: #{tpu_custom_call.1} parent=1 // pred_fallthru
      _
    // Predicated region
    $region30: #{tpu_custom_call.1} parent=1 // pred_check
      _
    $region31: #{tpu_custom_call.1} parent=1 // pred_check_branch
      %70 = sbr.rel (0) target = $region33
    $region32: #{tpu_custom_call.1} parent=1 // pred_region
      %71 = dma.done [#allocation5], 1024
    $region33: #{tpu_custom_call.1} parent=1 // pred_fallthru
      _
    // Predicated region
    $region34: #{tpu_custom_call.1} parent=1 // pred_check
      _
    $region35: #{tpu_custom_call.1} parent=1 // pred_check_branch
      %73 = sbr.rel (0) target = $region37
    $region36: #{tpu_custom_call.1} parent=1 // pred_region
      %74 = dma.done [#allocation8], 1024
    $region37: #{tpu_custom_call.1} parent=1 // pred_fallthru
      _
    %v76 = vld [vmem:[%s4] sm:$0x7]
    %v77 = vld [vmem:[#allocation2] sm:$0xff]
    %v78 = vld [vmem:[#allocation2 + $0x8] sm:$0xff]
    %v79 = vpack.c.bf16 %v78, %v77
    %v80 = vld [vmem:[#allocation4] sm:$0xf]
    %v81 = vld [vmem:[#allocation4 + $0x4] sm:$0xf]
    %v82 = vlaneseq
    %v83 = vshrl.u32 %v82, 7
    %v84 = vsub.s32 0, %v83
    %v85 = vrot.slane %v76, %v84
    %v88 = vunpack.c.l.b16 %v80
    %v89 = vunpack.c.l.b16 %v81
    %v90 = vpack.c.b16 %v89, %v88
    %vm92 = vcmask 130048
    %v94 = vsel %vm92, %v79, 0
    %96 = vmatprep.subr.bf16.mxu0 0
    %97 = vmatpush1.bf16.msra.mxu0 %v90
    %98 = vmatprep.subr.bf16.mxu0 0
    %99 = vmatpush1.bf16.msra.mxu0 0
    %100 = vmatprep.subr.bf16.mxu0 0
    %101 = vmatpush1.bf16.msra.mxu0 0
    %102 = vmatprep.subr.bf16.mxu0 0
    %103 = vmatpush1.bf16.msra.mxu0 0
    %104 = vmatprep.subr.bf16.mxu0 0
    %105 = vmatpush1.bf16.msra.mxu0 0
    %106 = vmatprep.subr.bf16.mxu0 0
    %107 = vmatpush1.bf16.msra.mxu0 0
    %108 = vmatprep.subr.bf16.mxu0 0
    %109 = vmatpush1.bf16.msra.mxu0 0
    %110 = vmatprep.subr.bf16.mxu0 0
    %111 = vmatpush1.bf16.msra.mxu0 0
    %112 = vmatprep.subr.bf16.mxu0 0
    %113 = vmatpush1.bf16.msra.mxu0 0
    %114 = vmatprep.subr.bf16.mxu0 0
    %115 = vmatpush1.bf16.msra.mxu0 0
    %116 = vmatprep.subr.bf16.mxu0 0
    %117 = vmatpush1.bf16.msra.mxu0 0
    %118 = vmatprep.subr.bf16.mxu0 0
    %119 = vmatpush1.bf16.msra.mxu0 0
    %120 = vmatprep.subr.bf16.mxu0 0
    %121 = vmatpush1.bf16.msra.mxu0 0
    %122 = vmatprep.subr.bf16.mxu0 0
    %123 = vmatpush1.bf16.msra.mxu0 0
    %124 = vmatprep.subr.bf16.mxu0 0
    %125 = vmatpush1.bf16.msra.mxu0 0
    %126 = vmatprep.subr.bf16.mxu0 0
    %127 = vmatpush1.bf16.msra.mxu0 0
    %128 = vmatprep.mubr.bf16.mxu0 0
    %129 = vmatmul.mubr.bf16.gmra.mrb[0].mxu0 %v94
    %v130 = vpop.f32.mrb[0].mxu0
    %v131 = vadd.f32 %v85, %v130
    %v132 = vpop.f32.mrb[0].mxu0
    %v133 = vpop.f32.mrb[0].mxu0
    %v134 = vadd.f32 %v85, %v133
    %v135 = vpop.f32.mrb[0].mxu0
    %136 = vdwg.mxu0
    %v137 = vmax.f32 %v131, 0.0
    %v138 = vmax.f32 %v134, 0.0
    %v139 = vpack.c.bf16 %v138, %v137
    %v140 = vld [vmem:[#allocation6] sm:$0xf]
    %v141 = vld [vmem:[#allocation6 + $0x4] sm:$0xf]
    %v142 = vld [vmem:[#allocation6 + $0x8] sm:$0xf]
    %v143 = vld [vmem:[#allocation6 + $0xc] sm:$0xf]
    %v144 = vld [vmem:[#allocation6 + $0x10] sm:$0xf]
    %v145 = vld [vmem:[#allocation6 + $0x14] sm:$0xf]
    %v146 = vld [vmem:[#allocation6 + $0x18] sm:$0xf]
    %v147 = vld [vmem:[#allocation6 + $0x1c] sm:$0xf]
    %v148 = vld [vmem:[#allocation6 + $0x20] sm:$0xf]
    %v149 = vld [vmem:[#allocation6 + $0x24] sm:$0xf]
    %v150 = vld [vmem:[#allocation6 + $0x28] sm:$0xf]
    %v151 = vld [vmem:[#allocation6 + $0x2c] sm:$0xf]
    %v152 = vld [vmem:[#allocation6 + $0x30] sm:$0xf]
    %v153 = vld [vmem:[#allocation6 + $0x34] sm:$0xf]
    %v154 = vld [vmem:[#allocation6 + $0x38] sm:$0xf]
    %v155 = vld [vmem:[#allocation6 + $0x3c] sm:$0xf]
    %v156 = vlaneseq
    %v157 = vshrl.u32 %v156, 7
    %v158 = vsub.s32 1, %v157
    %v159 = vrot.slane %v76, %v158
    %v176 = vunpack.c.l.b16 %v140
    %v177 = vunpack.c.l.b16 %v141
    %v178 = vunpack.c.l.b16 %v142
    %v179 = vunpack.c.l.b16 %v143
    %v180 = vunpack.c.l.b16 %v144
    %v181 = vunpack.c.l.b16 %v145
    %v182 = vunpack.c.l.b16 %v146
    %v183 = vunpack.c.l.b16 %v147
    %v184 = vunpack.c.l.b16 %v148
    %v185 = vunpack.c.l.b16 %v149
    %v186 = vunpack.c.l.b16 %v150
    %v187 = vunpack.c.l.b16 %v151
    %v188 = vunpack.c.l.b16 %v152
    %v189 = vunpack.c.l.b16 %v153
    %v190 = vunpack.c.l.b16 %v154
    %v191 = vunpack.c.l.b16 %v155
    %v192 = vpack.c.b16 %v177, %v176
    %v193 = vpack.c.b16 %v179, %v178
    %v194 = vpack.c.b16 %v181, %v180
    %v195 = vpack.c.b16 %v183, %v182
    %v196 = vpack.c.b16 %v185, %v184
    %v197 = vpack.c.b16 %v187, %v186
    %v198 = vpack.c.b16 %v189, %v188
    %v199 = vpack.c.b16 %v191, %v190
    %208 = vmatprep.subr.bf16.mxu0 0
    %209 = vmatpush1.bf16.msra.mxu0 %v192
    %210 = vmatprep.subr.bf16.mxu0 0
    %211 = vmatpush1.bf16.msra.mxu0 %v193
    %212 = vmatprep.subr.bf16.mxu0 0
    %213 = vmatpush1.bf16.msra.mxu0 %v194
    %214 = vmatprep.subr.bf16.mxu0 0
    %215 = vmatpush1.bf16.msra.mxu0 %v195
    %216 = vmatprep.subr.bf16.mxu0 0
    %217 = vmatpush1.bf16.msra.mxu0 %v196
    %218 = vmatprep.subr.bf16.mxu0 0
    %219 = vmatpush1.bf16.msra.mxu0 %v197
    %220 = vmatprep.subr.bf16.mxu0 0
    %221 = vmatpush1.bf16.msra.mxu0 %v198
    %222 = vmatprep.subr.bf16.mxu0 0
    %223 = vmatpush1.bf16.msra.mxu0 %v199
    %224 = vmatprep.subr.bf16.mxu0 0
    %225 = vmatpush1.bf16.msra.mxu0 0
    %226 = vmatprep.subr.bf16.mxu0 0
    %227 = vmatpush1.bf16.msra.mxu0 0
    %228 = vmatprep.subr.bf16.mxu0 0
    %229 = vmatpush1.bf16.msra.mxu0 0
    %230 = vmatprep.subr.bf16.mxu0 0
    %231 = vmatpush1.bf16.msra.mxu0 0
    %232 = vmatprep.subr.bf16.mxu0 0
    %233 = vmatpush1.bf16.msra.mxu0 0
    %234 = vmatprep.subr.bf16.mxu0 0
    %235 = vmatpush1.bf16.msra.mxu0 0
    %236 = vmatprep.subr.bf16.mxu0 0
    %237 = vmatpush1.bf16.msra.mxu0 0
    %238 = vmatprep.subr.bf16.mxu0 0
    %239 = vmatpush1.bf16.msra.mxu0 0
    %240 = vmatprep.mubr.bf16.mxu0 0
    %241 = vmatmul.mubr.bf16.gmra.mrb[0].mxu0 %v139
    %v242 = vpop.f32.mrb[0].mxu0
    %v243 = vadd.f32 %v159, %v242
    %v244 = vpop.f32.mrb[0].mxu0
    %v245 = vpop.f32.mrb[0].mxu0
    %v246 = vadd.f32 %v159, %v245
    %v247 = vpop.f32.mrb[0].mxu0
    %248 = vdwg.mxu0
    %v249 = vmax.f32 %v243, 0.0
    %v250 = vmax.f32 %v246, 0.0
    %v251 = vpack.c.bf16 %v250, %v249
    %v252 = vld [vmem:[#allocation7] sm:$0xf]
    %v253 = vld [vmem:[#allocation7 + $0x4] sm:$0xf]
    %v254 = vld [vmem:[#allocation7 + $0x8] sm:$0xf]
    %v255 = vld [vmem:[#allocation7 + $0xc] sm:$0xf]
    %v256 = vld [vmem:[#allocation7 + $0x10] sm:$0xf]
    %v257 = vld [vmem:[#allocation7 + $0x14] sm:$0xf]
    %v258 = vld [vmem:[#allocation7 + $0x18] sm:$0xf]
    %v259 = vld [vmem:[#allocation7 + $0x1c] sm:$0xf]
    %v260 = vld [vmem:[#allocation7 + $0x20] sm:$0xf]
    %v261 = vld [vmem:[#allocation7 + $0x24] sm:$0xf]
    %v262 = vld [vmem:[#allocation7 + $0x28] sm:$0xf]
    %v263 = vld [vmem:[#allocation7 + $0x2c] sm:$0xf]
    %v264 = vld [vmem:[#allocation7 + $0x30] sm:$0xf]
    %v265 = vld [vmem:[#allocation7 + $0x34] sm:$0xf]
    %v266 = vld [vmem:[#allocation7 + $0x38] sm:$0xf]
    %v267 = vld [vmem:[#allocation7 + $0x3c] sm:$0xf]
    %v268 = vlaneseq
    %v269 = vshrl.u32 %v268, 7
    %v270 = vsub.s32 2, %v269
    %v271 = vrot.slane %v76, %v270
    %v288 = vunpack.c.l.b16 %v252
    %v289 = vunpack.c.l.b16 %v253
    %v290 = vunpack.c.l.b16 %v254
    %v291 = vunpack.c.l.b16 %v255
    %v292 = vunpack.c.l.b16 %v256
    %v293 = vunpack.c.l.b16 %v257
    %v294 = vunpack.c.l.b16 %v258
    %v295 = vunpack.c.l.b16 %v259
    %v296 = vunpack.c.l.b16 %v260
    %v297 = vunpack.c.l.b16 %v261
    %v298 = vunpack.c.l.b16 %v262
    %v299 = vunpack.c.l.b16 %v263
    %v300 = vunpack.c.l.b16 %v264
    %v301 = vunpack.c.l.b16 %v265
    %v302 = vunpack.c.l.b16 %v266
    %v303 = vunpack.c.l.b16 %v267
    %v304 = vpack.c.b16 %v289, %v288
    %v305 = vpack.c.b16 %v291, %v290
    %v306 = vpack.c.b16 %v293, %v292
    %v307 = vpack.c.b16 %v295, %v294
    %v308 = vpack.c.b16 %v297, %v296
    %v309 = vpack.c.b16 %v299, %v298
    %v310 = vpack.c.b16 %v301, %v300
    %v311 = vpack.c.b16 %v303, %v302
    %320 = vmatprep.subr.bf16.mxu0 0
    %321 = vmatpush1.bf16.msra.mxu0 %v304
    %322 = vmatprep.subr.bf16.mxu0 0
    %323 = vmatpush1.bf16.msra.mxu0 %v305
    %324 = vmatprep.subr.bf16.mxu0 0
    %325 = vmatpush1.bf16.msra.mxu0 %v306
    %326 = vmatprep.subr.bf16.mxu0 0
    %327 = vmatpush1.bf16.msra.mxu0 %v307
    %328 = vmatprep.subr.bf16.mxu0 0
    %329 = vmatpush1.bf16.msra.mxu0 %v308
    %330 = vmatprep.subr.bf16.mxu0 0
    %331 = vmatpush1.bf16.msra.mxu0 %v309
    %332 = vmatprep.subr.bf16.mxu0 0
    %333 = vmatpush1.bf16.msra.mxu0 %v310
    %334 = vmatprep.subr.bf16.mxu0 0
    %335 = vmatpush1.bf16.msra.mxu0 %v311
    %336 = vmatprep.subr.bf16.mxu0 0
    %337 = vmatpush1.bf16.msra.mxu0 0
    %338 = vmatprep.subr.bf16.mxu0 0
    %339 = vmatpush1.bf16.msra.mxu0 0
    %340 = vmatprep.subr.bf16.mxu0 0
    %341 = vmatpush1.bf16.msra.mxu0 0
    %342 = vmatprep.subr.bf16.mxu0 0
    %343 = vmatpush1.bf16.msra.mxu0 0
    %344 = vmatprep.subr.bf16.mxu0 0
    %345 = vmatpush1.bf16.msra.mxu0 0
    %346 = vmatprep.subr.bf16.mxu0 0
    %347 = vmatpush1.bf16.msra.mxu0 0
    %348 = vmatprep.subr.bf16.mxu0 0
    %349 = vmatpush1.bf16.msra.mxu0 0
    %350 = vmatprep.subr.bf16.mxu0 0
    %351 = vmatpush1.bf16.msra.mxu0 0
    %352 = vmatprep.mubr.bf16.mxu0 0
    %353 = vmatmul.mubr.bf16.gmra.mrb[0].mxu0 %v251
    %v354 = vpop.f32.mrb[0].mxu0
    %v355 = vadd.f32 %v271, %v354
    %v356 = vpop.f32.mrb[0].mxu0
    %v357 = vpop.f32.mrb[0].mxu0
    %v358 = vadd.f32 %v271, %v357
    %v359 = vpop.f32.mrb[0].mxu0
    %360 = vdwg.mxu0
    %vm361 = vcmask 31744
    %362 = vst.msk [vmem:[%s5] sm:$0xff] %vm361, %v355
    %363 = vst.msk [vmem:[%s5 + $0x8] sm:$0xff] %vm361, %v358
    // Predicated region
    $region38: #{tpu_custom_call.1} parent=1 // pred_check
      _
    $region39: #{tpu_custom_call.1} parent=1 // pred_check_branch
      %365 = sbr.rel (0) target = $region41
    $region40: #{tpu_custom_call.1} parent=1 // pred_region
      _
    $region41: #{tpu_custom_call.1} parent=1 // pred_fallthru
      _
    // Predicated region
    $region42: #{tpu_custom_call.1} parent=1 // pred_check
      _
    $region43: #{tpu_custom_call.1} parent=1 // pred_check_branch
      %367 = sbr.rel (0) target = $region45
    $region44: #{tpu_custom_call.1} parent=1 // pred_region
      _
    $region45: #{tpu_custom_call.1} parent=1 // pred_fallthru
      _
    %368 = vsyncpa [#allocation3], 1
    %369 = vsyncpa [#allocation5], 1
    %370 = vsyncpa [#allocation8], 1

</llo_original>
